<compile_context>
chip_gen: v5e
topology: v5e:2x2
jax: 0.10.0
libtpu: 0.0.40
codegen_flags: <defaults>
</compile_context>

<pallas_src>
import functools

import jax
import jax.numpy as jnp
from jax.experimental import pallas as pl
from jax.experimental.pallas import tpu as pltpu

HEAD_LANES = 128  # lane-dense fused head width (2*action_dim must fit)


def actor_kernel(
    state_ref,                                   # (tb, S) bf16, VMEM
    w1_ref, b1_ref, w2_ref, b2_ref,              # bf16 weights / f32 biases, VMEM
    wh_ref, bh_ref,                              # fused head weight/bias, VMEM
    alpha_ref,                                   # (1,) f32 learned PReLU alpha, SMEM
    out_ref,                                     # (tb, 128) output slab
    *, bound, action_dim,                        # static module constants
):
    x = state_ref[...]                           # already bf16
    alpha = alpha_ref[0]                         # scalar read from SMEM (free)

    # ---- Linear(state_dim, 256) + PReLU ---- (bf16 MXU, f32 accumulate)
    h1 = jnp.dot(x, w1_ref[...], preferred_element_type=jnp.float32)
    h1 = h1 + b1_ref[...]
    h1 = jnp.where(h1 > 0.0, h1, alpha * h1)     # PReLU (f32 VPU)

    # ---- Linear(256, 256) + ReLU6 ----
    h2 = jnp.dot(h1.astype(jnp.bfloat16), w2_ref[...],
                 preferred_element_type=jnp.float32)
    h2 = h2 + b2_ref[...]
    h2 = jnp.clip(h2, 0.0, 6.0)                  # ReLU6

    # ---- fused heads: one Linear(256, 128) covering [mu | sigma | zero-pad] ----
    z = jnp.dot(h2.astype(jnp.bfloat16), wh_ref[...],
                preferred_element_type=jnp.float32)
    z = z + bh_ref[...]                          # (tb, 128)

    mu = jnp.tanh(z) * bound                     # Tanh * action_bound (EUP)
    # numerically stable softplus: max(z,0) + log1p(exp(-|z|))
    sig = jnp.maximum(z, 0.0) + jnp.log1p(jnp.exp(-jnp.abs(z)))

    lane = jax.lax.broadcasted_iota(jnp.int32, z.shape, dimension=1)
    # lanes [0, A) hold mu, lanes [A, 2A) hold sigma; the rest is padding.
    out_ref[...] = jnp.where(lane < action_dim, mu, sig).astype(out_ref.dtype)


def _round_up(x, m):
    return ((x + m - 1) // m) * m


def _pick_batch_tile(B):
    """Rows per grid step. Multiple of 16 (bf16 sublane tiling)."""
    Bp = _round_up(max(B, 16), 16)
    if Bp <= 256:
        # Small batch: one tile -- this regime is weight-DMA / launch bound and
        # extra grid steps only add ~0.35 us of pipeline overhead each.
        return Bp
    # Large batch: big tiles (up to 512 rows) for HBM-roofline efficiency, but
    # guarantee >= 2 grid steps so the parallel grid axis can shard across
    # v7x's two TensorCores.  VMEM use stays < 2 MB even at 512.
    return min(512, _round_up(pl.cdiv(Bp, 2), 16))


def prepare_actor_params(params):
    """One-time weight preparation (hoisted off the per-call critical path).

    Casts matmul weights to bf16 (halves weight DMA; f32 accumulation keeps
    accuracy) and packs the two head layers into a single lane-dense
    (256, 128) weight so the kernel emits one unmasked 128-wide store.
    """
    H = params["w1"].shape[1]
    A = params["wmu"].shape[1]
    assert 2 * A <= HEAD_LANES, "fused head assumes 2*action_dim <= 128"

    wh = (jnp.zeros((H, HEAD_LANES), jnp.float32)
          .at[:, :A].set(params["wmu"])
          .at[:, A:2 * A].set(params["wsig"])
          .astype(jnp.bfloat16))
    bh = (jnp.zeros((1, HEAD_LANES), jnp.float32)
          .at[:, :A].set(params["bmu"])
          .at[:, A:2 * A].set(params["bsig"]))
    return {
        "w1": params["w1"].astype(jnp.bfloat16),
        "b1": params["b1"].astype(jnp.float32).reshape(1, H),
        "w2": params["w2"].astype(jnp.bfloat16),
        "b2": params["b2"].astype(jnp.float32).reshape(1, H),
        "wh": wh,
        "bh": bh,
        # learned scalar -> passed to the kernel through SMEM (no recompiles,
        # jit-safe with traced params).  PyTorch nn.PReLU() default has
        # num_parameters=1, i.e. a single shared alpha.
        "alpha": jnp.asarray(params["prelu_alpha"], jnp.float32).reshape(1),
    }


def actor_forward(state, prepared, action_dim, action_bound, *,
                  out_dtype=jnp.float32):
    """state: (B, state_dim) f32/bf16. Returns (mu, sigma), each (B, action_dim)."""
    B, S = state.shape
    H = prepared["w1"].shape[1]
    A = action_dim

    # --- batch tiling (parallel grid over batch; >=2 steps for big B) ---
    tb = _pick_batch_tile(B)
    Bp = _round_up(B, tb)
    x = state.astype(jnp.bfloat16)               # kernel consumes bf16 directly
    if Bp != B:
        x = jnp.pad(x, ((0, Bp - B), (0, 0)))
    grid = (Bp // tb,)

    kern = functools.partial(
        actor_kernel,
        bound=float(action_bound),               # module-construction constant
        action_dim=A,
    )

    flops = 2 * Bp * (S * H + H * H + H * HEAD_LANES)
    bytes_accessed = (
        Bp * S * 2                                        # bf16 state in
        + (S * H + H * H + H * HEAD_LANES) * 2            # bf16 weights
        + (2 * H + HEAD_LANES) * 4                        # f32 biases
        + Bp * HEAD_LANES * jnp.dtype(out_dtype).itemsize # output slab
    )
    cost = pl.CostEstimate(
        flops=flops,
        transcendentals=3 * Bp * HEAD_LANES,
        bytes_accessed=int(bytes_accessed),
    )

    # weights/biases: whole-array blocks, constant block index -> DMA'd once,
    # kept resident in VMEM across all grid steps (~0.5 MB total).
    full = lambda arr: pl.BlockSpec(arr.shape, lambda i: (0, 0))

    out = pl.pallas_call(
        kern,
        out_shape=jax.ShapeDtypeStruct((Bp, HEAD_LANES), out_dtype),
        grid=grid,
        in_specs=[
            pl.BlockSpec((tb, S), lambda i: (i, 0)),       # state tile
            full(prepared["w1"]), full(prepared["b1"]),
            full(prepared["w2"]), full(prepared["b2"]),
            full(prepared["wh"]), full(prepared["bh"]),
            pl.BlockSpec(memory_space=pltpu.SMEM),         # learned PReLU alpha
        ],
        out_specs=pl.BlockSpec((tb, HEAD_LANES), lambda i: (i, 0)),
        compiler_params=pltpu.CompilerParams(
            dimension_semantics=("parallel",)),
        cost_estimate=cost,
    )(x, prepared["w1"], prepared["b1"], prepared["w2"], prepared["b2"],
      prepared["wh"], prepared["bh"], prepared["alpha"])

    mu = out[:B, :A]
    sigma = out[:B, A:2 * A]
    return mu, sigma


def init_actor_params(key, state_dim, action_dim, hidden=256, std=0.1):
    """Mirrors init_weights: Linear weights ~ N(0, 0.1), biases = 0.01.
    PReLU alpha keeps its PyTorch default of 0.25. Weights stored (in, out)."""
    k1, k2, k3, k4 = jax.random.split(key, 4)
    return {
        "w1": std * jax.random.normal(k1, (state_dim, hidden), jnp.float32),
        "b1": jnp.full((1, hidden), 0.01, jnp.float32),
        "w2": std * jax.random.normal(k2, (hidden, hidden), jnp.float32),
        "b2": jnp.full((1, hidden), 0.01, jnp.float32),
        "wmu": std * jax.random.normal(k3, (hidden, action_dim), jnp.float32),
        "bmu": jnp.full((1, action_dim), 0.01, jnp.float32),
        "wsig": std * jax.random.normal(k4, (hidden, action_dim), jnp.float32),
        "bsig": jnp.full((1, action_dim), 0.01, jnp.float32),
        "prelu_alpha": 0.25,
    }


if __name__ == "__main__":
    key = jax.random.PRNGKey(0)
    k_param, k_state = jax.random.split(key)

    batch = 8
    state_dim = 32
    action_dim = 8
    action_bound = 2.0

    params = init_actor_params(k_param, state_dim, action_dim)
    prepared = prepare_actor_params(params)      # one-time, cached weight prep
    state = jax.random.normal(k_state, (batch, state_dim), jnp.float32)

    # jit with traced (prepared) params: alpha rides along as an SMEM array,
    # so optimizer updates to it never trigger a recompile.
    fwd = jax.jit(functools.partial(actor_forward,
                                    action_dim=action_dim,
                                    action_bound=action_bound))
    mu, sigma = fwd(state, prepared)
    jax.block_until_ready((mu, sigma))

    # pure-JAX reference mirroring the kernel's precision (bf16 weights,
    # bf16 matmul inputs, f32 accumulation / activations).  bf16 weight
    # truncation (~3 significant digits) is the accepted precision for this
    # actor; the reference isolates kernel-logic errors from that choice.
    def ref(x, p, bound):
        a = p["prelu_alpha"]

        def mm(u, w):
            return jnp.dot(u.astype(jnp.bfloat16), w.astype(jnp.bfloat16),
                           preferred_element_type=jnp.float32)

        h1 = mm(x, p["w1"]) + p["b1"]
        h1 = jnp.where(h1 > 0.0, h1, a * h1)
        h2 = jnp.clip(mm(h1, p["w2"]) + p["b2"], 0.0, 6.0)
        m = jnp.tanh(mm(h2, p["wmu"]) + p["bmu"]) * bound
        s = jax.nn.softplus(mm(h2, p["wsig"]) + p["bsig"])
        return m, s

    mu_ref, sigma_ref = ref(state, params, action_bound)
    assert mu.shape == (batch, action_dim) and sigma.shape == (batch, action_dim)
    assert jnp.allclose(mu, mu_ref, atol=1e-3, rtol=1e-3), "mu mismatch"
    assert jnp.allclose(sigma, sigma_ref, atol=1e-3, rtol=1e-3), "sigma mismatch"

    print("KERNEL_OK")
</pallas_src>

<mosaic_0001>
module attributes {stable_mosaic.version = 11 : i64} {
  func.func @actor_kernel(%arg0: i32, %arg1: memref<16x32xbf16, #tpu.memory_space<vmem>>, %arg2: memref<32x256xbf16, #tpu.memory_space<vmem>>, %arg3: memref<1x256xf32, #tpu.memory_space<vmem>>, %arg4: memref<256x256xbf16, #tpu.memory_space<vmem>>, %arg5: memref<1x256xf32, #tpu.memory_space<vmem>>, %arg6: memref<256x128xbf16, #tpu.memory_space<vmem>>, %arg7: memref<1x128xf32, #tpu.memory_space<vmem>>, %arg8: memref<1xf32, #tpu.memory_space<smem>>, %arg9: memref<16x128xf32, #tpu.memory_space<vmem>>) attributes {dimension_semantics = [#tpu.dimension_semantics<parallel>], iteration_bounds = array<i64: 1>, scalar_prefetch = 0 : i64, scratch_operands = 0 : i64, tpu.core_type = #tpu.core_type<tc>, window_params = [{transform_indices = @transform_0, window_bounds = array<i64: 16, 32>}, {pipeline_mode = #tpu.pipeline_mode<synchronous>, transform_indices = @transform_1, window_bounds = array<i64: 32, 256>}, {pipeline_mode = #tpu.pipeline_mode<synchronous>, transform_indices = @transform_2, window_bounds = array<i64: 1, 256>}, {pipeline_mode = #tpu.pipeline_mode<synchronous>, transform_indices = @transform_3, window_bounds = array<i64: 256, 256>}, {pipeline_mode = #tpu.pipeline_mode<synchronous>, transform_indices = @transform_4, window_bounds = array<i64: 1, 256>}, {pipeline_mode = #tpu.pipeline_mode<synchronous>, transform_indices = @transform_5, window_bounds = array<i64: 256, 128>}, {pipeline_mode = #tpu.pipeline_mode<synchronous>, transform_indices = @transform_6, window_bounds = array<i64: 1, 128>}, {transform_indices = @transform_7, window_bounds = array<i64: 1>}, {transform_indices = @transform_8, window_bounds = array<i64: 16, 128>}]} {
    %c0 = arith.constant 0 : index
    %c0_0 = arith.constant 0 : index
    %0 = vector.load %arg1[%c0, %c0_0] : memref<16x32xbf16, #tpu.memory_space<vmem>>, vector<16x32xbf16>
    %c0_1 = arith.constant 0 : index
    %1 = memref.load %arg8[%c0_1] : memref<1xf32, #tpu.memory_space<smem>>
    %c0_2 = arith.constant 0 : index
    %c0_3 = arith.constant 0 : index
    %2 = vector.load %arg2[%c0_2, %c0_3] : memref<32x256xbf16, #tpu.memory_space<vmem>>, vector<32x256xbf16>
    %cst = arith.constant dense<0.000000e+00> : vector<16x256xf32>
    %3 = tpu.matmul %0, %2, %cst {dimension_numbers = #tpu.dot_dimension_numbers<[1], [0], [0], [1], [0, 0, 1, 1], [], []>} : vector<16x32xbf16>, vector<32x256xbf16>, vector<16x256xf32> -> vector<16x256xf32>
    %c0_4 = arith.constant 0 : index
    %c0_5 = arith.constant 0 : index
    %4 = vector.load %arg3[%c0_4, %c0_5] : memref<1x256xf32, #tpu.memory_space<vmem>>, vector<1x256xf32>
    %5 = vector.broadcast %4 : vector<1x256xf32> to vector<16x256xf32>
    %6 = arith.addf %3, %5 : vector<16x256xf32>
    %cst_6 = arith.constant 0.000000e+00 : f32
    %7 = vector.broadcast %cst_6 : f32 to vector<16x256xf32>
    %8 = arith.cmpf ogt, %6, %7 : vector<16x256xf32>
    %9 = vector.broadcast %1 : f32 to vector<16x256xf32>
    %10 = arith.mulf %9, %6 : vector<16x256xf32>
    %11 = arith.select %8, %6, %10 : vector<16x256xi1>, vector<16x256xf32>
    %12 = arith.truncf %11 : vector<16x256xf32> to vector<16x256xbf16>
    %c0_7 = arith.constant 0 : index
    %c0_8 = arith.constant 0 : index
    %13 = vector.load %arg4[%c0_7, %c0_8] : memref<256x256xbf16, #tpu.memory_space<vmem>>, vector<256x256xbf16>
    %cst_9 = arith.constant dense<0.000000e+00> : vector<16x256xf32>
    %14 = tpu.matmul %12, %13, %cst_9 {dimension_numbers = #tpu.dot_dimension_numbers<[1], [0], [0], [1], [0, 0, 1, 1], [], []>} : vector<16x256xbf16>, vector<256x256xbf16>, vector<16x256xf32> -> vector<16x256xf32>
    %c0_10 = arith.constant 0 : index
    %c0_11 = arith.constant 0 : index
    %15 = vector.load %arg5[%c0_10, %c0_11] : memref<1x256xf32, #tpu.memory_space<vmem>>, vector<1x256xf32>
    %16 = vector.broadcast %15 : vector<1x256xf32> to vector<16x256xf32>
    %17 = arith.addf %14, %16 : vector<16x256xf32>
    %cst_12 = arith.constant 0.000000e+00 : f32
    %cst_13 = arith.constant 6.000000e+00 : f32
    %18 = vector.broadcast %cst_12 : f32 to vector<16x256xf32>
    %19 = arith.maximumf %18, %17 : vector<16x256xf32>
    %20 = vector.broadcast %cst_13 : f32 to vector<16x256xf32>
    %21 = arith.minimumf %20, %19 : vector<16x256xf32>
    %22 = arith.truncf %21 : vector<16x256xf32> to vector<16x256xbf16>
    %c0_14 = arith.constant 0 : index
    %c0_15 = arith.constant 0 : index
    %23 = vector.load %arg6[%c0_14, %c0_15] : memref<256x128xbf16, #tpu.memory_space<vmem>>, vector<256x128xbf16>
    %cst_16 = arith.constant dense<0.000000e+00> : vector<16x128xf32>
    %24 = tpu.matmul %22, %23, %cst_16 {dimension_numbers = #tpu.dot_dimension_numbers<[1], [0], [0], [1], [0, 0, 1, 1], [], []>} : vector<16x256xbf16>, vector<256x128xbf16>, vector<16x128xf32> -> vector<16x128xf32>
    %c0_17 = arith.constant 0 : index
    %c0_18 = arith.constant 0 : index
    %25 = vector.load %arg7[%c0_17, %c0_18] : memref<1x128xf32, #tpu.memory_space<vmem>>, vector<1x128xf32>
    %26 = vector.broadcast %25 : vector<1x128xf32> to vector<16x128xf32>
    %27 = arith.addf %24, %26 : vector<16x128xf32>
    %28 = math.tanh %27 : vector<16x128xf32>
    %cst_19 = arith.constant 2.000000e+00 : f32
    %29 = vector.broadcast %cst_19 : f32 to vector<16x128xf32>
    %30 = arith.mulf %28, %29 : vector<16x128xf32>
    %cst_20 = arith.constant 0.000000e+00 : f32
    %31 = vector.broadcast %cst_20 : f32 to vector<16x128xf32>
    %32 = arith.maximumf %27, %31 : vector<16x128xf32>
    %33 = math.absf %27 : vector<16x128xf32>
    %cst_21 = arith.constant 0.000000e+00 : f32
    %34 = vector.broadcast %cst_21 : f32 to vector<16x128xf32>
    %35 = arith.subf %34, %33 : vector<16x128xf32>
    %36 = math.exp %35 : vector<16x128xf32>
    %37 = math.log1p %36 : vector<16x128xf32>
    %38 = arith.addf %32, %37 : vector<16x128xf32>
    %39 = tpu.iota {dimensions = array<i32: 1>} : vector<16x128xi32>
    %c8_i32 = arith.constant 8 : i32
    %40 = vector.broadcast %c8_i32 : i32 to vector<16x128xi32>
    %41 = arith.cmpi slt, %39, %40 : vector<16x128xi32>
    %42 = arith.select %41, %30, %38 : vector<16x128xi1>, vector<16x128xf32>
    %c0_22 = arith.constant 0 : index
    %c0_23 = arith.constant 0 : index
    %43 = vector.load %arg9[%c0_22, %c0_23] : memref<16x128xf32, #tpu.memory_space<vmem>>, vector<16x128xf32>
    tpu.vector_store %arg9[%c0_22, %c0_23], %42 {strides = array<i32>} : memref<16x128xf32, #tpu.memory_space<vmem>>, vector<16x128xf32>,
    return
  }
  func.func @transform_0(%arg0: i32) -> (i32, i32) {
    %c0_i32 = arith.constant 0 : i32
    %c0_i32_0 = arith.constant 0 : i32
    return %arg0, %c0_i32 : i32, i32
  }
  func.func @transform_1(%arg0: i32) -> (i32, i32) {
    %c0_i32 = arith.constant 0 : i32
    %c0_i32_0 = arith.constant 0 : i32
    %c0_i32_1 = arith.constant 0 : i32
    return %c0_i32, %c0_i32_0 : i32, i32
  }
  func.func @transform_2(%arg0: i32) -> (i32, i32) {
    %c0_i32 = arith.constant 0 : i32
    %c0_i32_0 = arith.constant 0 : i32
    %c0_i32_1 = arith.constant 0 : i32
    return %c0_i32, %c0_i32_0 : i32, i32
  }
  func.func @transform_3(%arg0: i32) -> (i32, i32) {
    %c0_i32 = arith.constant 0 : i32
    %c0_i32_0 = arith.constant 0 : i32
    %c0_i32_1 = arith.constant 0 : i32
    return %c0_i32, %c0_i32_0 : i32, i32
  }
  func.func @transform_4(%arg0: i32) -> (i32, i32) {
    %c0_i32 = arith.constant 0 : i32
    %c0_i32_0 = arith.constant 0 : i32
    %c0_i32_1 = arith.constant 0 : i32
    return %c0_i32, %c0_i32_0 : i32, i32
  }
  func.func @transform_5(%arg0: i32) -> (i32, i32) {
    %c0_i32 = arith.constant 0 : i32
    %c0_i32_0 = arith.constant 0 : i32
    %c0_i32_1 = arith.constant 0 : i32
    return %c0_i32, %c0_i32_0 : i32, i32
  }
  func.func @transform_6(%arg0: i32) -> (i32, i32) {
    %c0_i32 = arith.constant 0 : i32
    %c0_i32_0 = arith.constant 0 : i32
    %c0_i32_1 = arith.constant 0 : i32
    return %c0_i32, %c0_i32_0 : i32, i32
  }
  func.func @transform_7(%arg0: i32) -> i32 {
    %c0_i32 = arith.constant 0 : i32
    %c0_i32_0 = arith.constant 0 : i32
    return %c0_i32 : i32
  }
  func.func @transform_8(%arg0: i32) -> (i32, i32) {
    %c0_i32 = arith.constant 0 : i32
    %c0_i32_0 = arith.constant 0 : i32
    return %arg0, %c0_i32 : i32, i32
  }
}

</mosaic_0001>

<llo_original>
// kernel: actor_forward.1
$region0: #{actor_forward.1}
  #allocation0 [shape = 'u32[]', space=smem, size = 0x4, offset = 0x4, fixed_abs, tag = 'smem constant byte address 0x4 - core index']
  #allocation1 [shape = 'u32[72,128]{1,0:T(1,128)}', space=vmem, size = 0x9000, scoped, tag = 'internal scratch']
  #allocation2 [shape = 'f32[1]{0:T(128)S(6)}', space=smem, size = 0x200, scoped, tag = 'scoped memory for actor_forward.1']
  %s0 = inlined_call_operand.vmem [shape: bf16[16,32], index: 0, kind: input, shape index: {}]
  %s1 = inlined_call_operand.hbm [shape: bf16[32,256], index: 1, kind: input, shape index: {}]
  %s2 = inlined_call_operand.vmem [shape: f32[1,256], index: 2, kind: input, shape index: {}]
  %s3 = inlined_call_operand.hbm [shape: bf16[256,256], index: 3, kind: input, shape index: {}]
  %s4 = inlined_call_operand.vmem [shape: f32[1,256], index: 4, kind: input, shape index: {}]
  %s5 = inlined_call_operand.hbm [shape: bf16[256,128], index: 5, kind: input, shape index: {}]
  %s6 = inlined_call_operand.vmem [shape: f32[1,128], index: 6, kind: input, shape index: {}]
  %s7 = inlined_call_operand.<no memory space> [shape: f32[1], index: 7, kind: input, shape index: {}]
  %s8 = inlined_call_operand.vmem [shape: f32[16,128], index: 8, kind: output, shape index: {}]
  %s9 = sld [smem:[#allocation0]]
  $region54: #{actor_forward.1} parent=0
    _
  %s11 = ssub.s32 1, %s9
  %s12 = scalar_select 0, %s11, %s9
  %13 = sst [smem:[#allocation2]] %s7
  $region1: #{actor_forward.1} parent=0
    #allocation3 [shape = 'u8[16384]{0}', space=vmem, size = 0x4000, scoped, tag = 'input window, operand 1, single buffered']
    #allocation4 [shape = 's32[1]{0}', space=sflag, size = 0x4, scoped, tag = 'scoped memory for actor_forward.1']
    #allocation5 [shape = 'u8[131072]{0}', space=vmem, size = 0x20000, scoped, tag = 'input window, operand 3, single buffered']
    #allocation6 [shape = 's32[1]{0}', space=sflag, size = 0x4, scoped, tag = 'scoped memory for actor_forward.1']
    #allocation7 [shape = 'u8[65536]{0}', space=vmem, size = 0x10000, scoped, tag = 'input window, operand 5, single buffered']
    %14 = vsyncpa [#allocation4], 0
    %15 = vsyncpa [#allocation6], 0
    // Predicated region
    $region2: #{actor_forward.1} parent=1 // pred_check
      _
    $region3: #{actor_forward.1} parent=1 // pred_check_branch
      %17 = sbr.rel (0) target = $region5
    $region4: #{actor_forward.1} parent=1 // pred_region
      _
    $region5: #{actor_forward.1} parent=1 // pred_fallthru
      _
    // Predicated region
    $region6: #{actor_forward.1} parent=1 // pred_check
      _
    $region7: #{actor_forward.1} parent=1 // pred_check_branch
      %19 = sbr.rel (0) target = $region9
    $region8: #{actor_forward.1} parent=1 // pred_region
      %21 = vsyncadd [#allocation4], 0
      %s22 = sshll.u32 %s1, 4
      %s23 = int_to_ptr.hbm [resolvable:$true] %s22
      %s24 = sshll.u32 [#allocation3], 4
      %s25 = int_to_ptr.vmem [resolvable:$true] %s24
      %30 = dma.hbm_to_vmem [thread:$0]  %s23, 512, %s25, [#allocation4], 128, 128, 8
    $region9: #{actor_forward.1} parent=1 // pred_fallthru
      _
    // Predicated region
    $region10: #{actor_forward.1} parent=1 // pred_check
      _
    $region11: #{actor_forward.1} parent=1 // pred_check_branch
      %32 = sbr.rel (0) target = $region13
    $region12: #{actor_forward.1} parent=1 // pred_region
      _
    $region13: #{actor_forward.1} parent=1 // pred_fallthru
      _
    // Predicated region
    $region14: #{actor_forward.1} parent=1 // pred_check
      _
    $region15: #{actor_forward.1} parent=1 // pred_check_branch
      %34 = sbr.rel (0) target = $region17
    $region16: #{actor_forward.1} parent=1 // pred_region
      %36 = vsyncadd [#allocation6], 0
      %s37 = sshll.u32 %s3, 4
      %s38 = int_to_ptr.hbm [resolvable:$true] %s37
      %s39 = sshll.u32 [#allocation5], 4
      %s40 = int_to_ptr.vmem [resolvable:$true] %s39
      %45 = dma.hbm_to_vmem [thread:$0]  %s38, 4096, %s40, [#allocation6], 128, 128, 8
    $region17: #{actor_forward.1} parent=1 // pred_fallthru
      _
    // Predicated region
    $region18: #{actor_forward.1} parent=1 // pred_check
      _
    $region19: #{actor_forward.1} parent=1 // pred_check_branch
      %47 = sbr.rel (0) target = $region21
    $region20: #{actor_forward.1} parent=1 // pred_region
      _
    $region21: #{actor_forward.1} parent=1 // pred_fallthru
      _
    // Predicated region
    $region22: #{actor_forward.1} parent=1 // pred_check
      _
    $region23: #{actor_forward.1} parent=1 // pred_check_branch
      %49 = sbr.rel (0) target = $region25
    $region24: #{actor_forward.1} parent=1 // pred_region
      %51 = vsyncadd [#allocation6], 0
      %s52 = sshll.u32 %s5, 4
      %s53 = int_to_ptr.hbm [resolvable:$true] %s52
      %s54 = sshll.u32 [#allocation7], 4
      %s55 = int_to_ptr.vmem [resolvable:$true] %s54
      %60 = dma.hbm_to_vmem [thread:$0]  %s53, 2048, %s55, [#allocation6], 64, 64, 4
    $region25: #{actor_forward.1} parent=1 // pred_fallthru
      _
    // Predicated region
    $region26: #{actor_forward.1} parent=1 // pred_check
      _
    $region27: #{actor_forward.1} parent=1 // pred_check_branch
      %62 = sbr.rel (0) target = $region29
    $region28: #{actor_forward.1} parent=1 // pred_region
      _
    $region29: #{actor_forward.1} parent=1 // pred_fallthru
      _
    // Predicated region
    $region30: #{actor_forward.1} parent=1 // pred_check
      _
    $region31: #{actor_forward.1} parent=1 // pred_check_branch
      %64 = sbr.rel (0) target = $region33
    $region32: #{actor_forward.1} parent=1 // pred_region
      _
    $region33: #{actor_forward.1} parent=1 // pred_fallthru
      _
    // Predicated region
    $region34: #{actor_forward.1} parent=1 // pred_check
      _
    $region35: #{actor_forward.1} parent=1 // pred_check_branch
      %66 = sbr.rel (0) target = $region37
    $region36: #{actor_forward.1} parent=1 // pred_region
      %68 = dma.done [#allocation4], 512
    $region37: #{actor_forward.1} parent=1 // pred_fallthru
      _
    // Predicated region
    $region38: #{actor_forward.1} parent=1 // pred_check
      _
    $region39: #{actor_forward.1} parent=1 // pred_check_branch
      %70 = sbr.rel (0) target = $region41
    $region40: #{actor_forward.1} parent=1 // pred_region
      %72 = dma.done [#allocation6], 4096
    $region41: #{actor_forward.1} parent=1 // pred_fallthru
      _
    // Predicated region
    $region42: #{actor_forward.1} parent=1 // pred_check
      _
    $region43: #{actor_forward.1} parent=1 // pred_check_branch
      %74 = sbr.rel (0) target = $region45
    $region44: #{actor_forward.1} parent=1 // pred_region
      %76 = dma.done [#allocation6], 2048
    $region45: #{actor_forward.1} parent=1 // pred_fallthru
      _
    %v78 = vld [vmem:[%s0] sm:$0xf]
    %v79 = vld [vmem:[%s0 + $0x4] sm:$0xf]
    %s80 = sld [smem:[#allocation2]]
    %v81 = vld [vmem:[#allocation3] sm:$0xff]
    %v82 = vld [vmem:[#allocation3 + $0x8] sm:$0xff]
    %v83 = vld [vmem:[#allocation3 + $0x10] sm:$0xff]
    %v84 = vld [vmem:[#allocation3 + $0x18] sm:$0xff]
    %v85 = vld [vmem:[%s2] sm:$0x3]
    %v87 = vperm.slane %v85, 0
    %v88 = vperm.slane %v85, 1
    %v93 = vunpack.c.l.b16 %v78
    %v94 = vunpack.c.l.b16 %v79
    %v95 = vpack.c.b16 %v94, %v93
    %v100 = vunpack.c.l.b16 %v81
    %v101 = vunpack.c.h.b16 %v81
    %v102 = vunpack.c.l.b16 %v82
    %v103 = vunpack.c.h.b16 %v82
    %v104 = vunpack.c.l.b16 %v83
    %v105 = vunpack.c.h.b16 %v83
    %v106 = vunpack.c.l.b16 %v84
    %v107 = vunpack.c.h.b16 %v84
    %v108 = vpack.c.b16 %v102, %v100
    %v109 = vpack.c.b16 %v103, %v101
    %v110 = vpack.c.b16 %v106, %v104
    %v111 = vpack.c.b16 %v107, %v105
    %vm116 = vcmask 261120
    %v118 = vsel %vm116, %v95, 0
    %120 = vmatpush.bf16.msra.mxu0 0
    %121 = vmatpush.bf16.msra.mxu0 0
    %122 = vmatpush.bf16.msra.mxu0 0
    %123 = vmatpush.bf16.msra.mxu0 0
    %124 = vmatpush.bf16.msra.mxu0 0
    %125 = vmatpush.bf16.msra.mxu0 0
    %126 = vmatpush.bf16.msra.mxu0 %v110
    %127 = vmatpush.bf16.msra.mxu0 %v108
    %128 = vmatmul.bf16.gmra.mxu0 %v118
    %v129 = vpop.f32.mrf.mxu0
    %v130 = vadd.f32 %v87, %v129
    %v131 = vpop.f32.mrf.mxu0
    %v132 = vadd.f32 %v87, %v131
    %133 = vdwg.mxu0
    %134 = vmatpush.bf16.msra.mxu0 0
    %135 = vmatpush.bf16.msra.mxu0 0
    %136 = vmatpush.bf16.msra.mxu0 0
    %137 = vmatpush.bf16.msra.mxu0 0
    %138 = vmatpush.bf16.msra.mxu0 0
    %139 = vmatpush.bf16.msra.mxu0 0
    %140 = vmatpush.bf16.msra.mxu0 %v111
    %141 = vmatpush.bf16.msra.mxu0 %v109
    %142 = vmatmul.bf16.gmra.mxu0 %v118
    %v143 = vpop.f32.mrf.mxu0
    %v144 = vadd.f32 %v88, %v143
    %v145 = vpop.f32.mrf.mxu0
    %v146 = vadd.f32 %v88, %v145
    %147 = vdwg.mxu0
    %vm148 = vcmp.gt.f32.partialorder %v130, 0.0
    %vm149 = vcmp.gt.f32.partialorder %v144, 0.0
    %vm150 = vcmp.gt.f32.partialorder %v132, 0.0
    %vm151 = vcmp.gt.f32.partialorder %v146, 0.0
    %v152 = vstv %s80
    %v153 = vmul.f32 %v152, %v130
    %v154 = vmul.f32 %v152, %v144
    %v155 = vmul.f32 %v152, %v132
    %v156 = vmul.f32 %v152, %v146
    %v157 = vsel %vm148, %v130, %v153
    %v158 = vsel %vm149, %v144, %v154
    %v159 = vsel %vm150, %v132, %v155
    %v160 = vsel %vm151, %v146, %v156
    %v161 = vpack.c.bf16 %v159, %v157
    %v162 = vpack.c.bf16 %v160, %v158
    %v163 = vld [vmem:[#allocation5] sm:$0xff]
    %v164 = vld [vmem:[#allocation5 + $0x8] sm:$0xff]
    %v165 = vld [vmem:[#allocation5 + $0x10] sm:$0xff]
    %v166 = vld [vmem:[#allocation5 + $0x18] sm:$0xff]
    %v167 = vld [vmem:[#allocation5 + $0x20] sm:$0xff]
    %v168 = vld [vmem:[#allocation5 + $0x28] sm:$0xff]
    %v169 = vld [vmem:[#allocation5 + $0x30] sm:$0xff]
    %v170 = vld [vmem:[#allocation5 + $0x38] sm:$0xff]
    %v171 = vld [vmem:[#allocation5 + $0x40] sm:$0xff]
    %v172 = vld [vmem:[#allocation5 + $0x48] sm:$0xff]
    %v173 = vld [vmem:[#allocation5 + $0x50] sm:$0xff]
    %v174 = vld [vmem:[#allocation5 + $0x58] sm:$0xff]
    %v175 = vld [vmem:[#allocation5 + $0x60] sm:$0xff]
    %v176 = vld [vmem:[#allocation5 + $0x68] sm:$0xff]
    %v177 = vld [vmem:[#allocation5 + $0x70] sm:$0xff]
    %v178 = vld [vmem:[#allocation5 + $0x78] sm:$0xff]
    %v179 = vld [vmem:[#allocation5 + $0x80] sm:$0xff]
    %v180 = vld [vmem:[#allocation5 + $0x88] sm:$0xff]
    %v181 = vld [vmem:[#allocation5 + $0x90] sm:$0xff]
    %v182 = vld [vmem:[#allocation5 + $0x98] sm:$0xff]
    %v183 = vld [vmem:[#allocation5 + $0xa0] sm:$0xff]
    %v184 = vld [vmem:[#allocation5 + $0xa8] sm:$0xff]
    %v185 = vld [vmem:[#allocation5 + $0xb0] sm:$0xff]
    %v186 = vld [vmem:[#allocation5 + $0xb8] sm:$0xff]
    %v187 = vld [vmem:[#allocation5 + $0xc0] sm:$0xff]
    %v188 = vld [vmem:[#allocation5 + $0xc8] sm:$0xff]
    %v189 = vld [vmem:[#allocation5 + $0xd0] sm:$0xff]
    %v190 = vld [vmem:[#allocation5 + $0xd8] sm:$0xff]
    %v191 = vld [vmem:[#allocation5 + $0xe0] sm:$0xff]
    %v192 = vld [vmem:[#allocation5 + $0xe8] sm:$0xff]
    %v193 = vld [vmem:[#allocation5 + $0xf0] sm:$0xff]
    %v194 = vld [vmem:[#allocation5 + $0xf8] sm:$0xff]
    %v195 = vld [vmem:[%s4] sm:$0x3]
    %v197 = vperm.slane %v195, 0
    %v198 = vperm.slane %v195, 1
    %v233 = vunpack.c.l.b16 %v163
    %v234 = vunpack.c.h.b16 %v163
    %v235 = vunpack.c.l.b16 %v164
    %v236 = vunpack.c.h.b16 %v164
    %v237 = vunpack.c.l.b16 %v165
    %v238 = vunpack.c.h.b16 %v165
    %v239 = vunpack.c.l.b16 %v166
    %v240 = vunpack.c.h.b16 %v166
    %v241 = vunpack.c.l.b16 %v167
    %v242 = vunpack.c.h.b16 %v167
    %v243 = vunpack.c.l.b16 %v168
    %v244 = vunpack.c.h.b16 %v168
    %v245 = vunpack.c.l.b16 %v169
    %v246 = vunpack.c.h.b16 %v169
    %v247 = vunpack.c.l.b16 %v170
    %v248 = vunpack.c.h.b16 %v170
    %v249 = vunpack.c.l.b16 %v171
    %v250 = vunpack.c.h.b16 %v171
    %v251 = vunpack.c.l.b16 %v172
    %v252 = vunpack.c.h.b16 %v172
    %v253 = vunpack.c.l.b16 %v173
    %v254 = vunpack.c.h.b16 %v173
    %v255 = vunpack.c.l.b16 %v174
    %v256 = vunpack.c.h.b16 %v174
    %v257 = vunpack.c.l.b16 %v175
    %v258 = vunpack.c.h.b16 %v175
    %v259 = vunpack.c.l.b16 %v176
    %v260 = vunpack.c.h.b16 %v176
    %v261 = vunpack.c.l.b16 %v177
    %v262 = vunpack.c.h.b16 %v177
    %v263 = vunpack.c.l.b16 %v178
    %v264 = vunpack.c.h.b16 %v178
    %v265 = vunpack.c.l.b16 %v179
    %v266 = vunpack.c.h.b16 %v179
    %v267 = vunpack.c.l.b16 %v180
    %v268 = vunpack.c.h.b16 %v180
    %v269 = vunpack.c.l.b16 %v181
    %v270 = vunpack.c.h.b16 %v181
    %v271 = vunpack.c.l.b16 %v182
    %v272 = vunpack.c.h.b16 %v182
    %v273 = vunpack.c.l.b16 %v183
    %v274 = vunpack.c.h.b16 %v183
    %v275 = vunpack.c.l.b16 %v184
    %v276 = vunpack.c.h.b16 %v184
    %v277 = vunpack.c.l.b16 %v185
    %v278 = vunpack.c.h.b16 %v185
    %v279 = vunpack.c.l.b16 %v186
    %v280 = vunpack.c.h.b16 %v186
    %v281 = vunpack.c.l.b16 %v187
    %v282 = vunpack.c.h.b16 %v187
    %v283 = vunpack.c.l.b16 %v188
    %v284 = vunpack.c.h.b16 %v188
    %v285 = vunpack.c.l.b16 %v189
    %v286 = vunpack.c.h.b16 %v189
    %v287 = vunpack.c.l.b16 %v190
    %v288 = vunpack.c.h.b16 %v190
    %v289 = vunpack.c.l.b16 %v191
    %v290 = vunpack.c.h.b16 %v191
    %v291 = vunpack.c.l.b16 %v192
    %v292 = vunpack.c.h.b16 %v192
    %v293 = vunpack.c.l.b16 %v193
    %v294 = vunpack.c.h.b16 %v193
    %v295 = vunpack.c.l.b16 %v194
    %v296 = vunpack.c.h.b16 %v194
    %v297 = vpack.c.b16 %v235, %v233
    %v298 = vpack.c.b16 %v236, %v234
    %v299 = vpack.c.b16 %v239, %v237
    %v300 = vpack.c.b16 %v240, %v238
    %v301 = vpack.c.b16 %v243, %v241
    %v302 = vpack.c.b16 %v244, %v242
    %v303 = vpack.c.b16 %v247, %v245
    %v304 = vpack.c.b16 %v248, %v246
    %v305 = vpack.c.b16 %v251, %v249
    %v306 = vpack.c.b16 %v252, %v250
    %v307 = vpack.c.b16 %v255, %v253
    %v308 = vpack.c.b16 %v256, %v254
    %v309 = vpack.c.b16 %v259, %v257
    %v310 = vpack.c.b16 %v260, %v258
    %v311 = vpack.c.b16 %v263, %v261
    %v312 = vpack.c.b16 %v264, %v262
    %v313 = vpack.c.b16 %v267, %v265
    %v314 = vpack.c.b16 %v268, %v266
    %v315 = vpack.c.b16 %v271, %v269
    %v316 = vpack.c.b16 %v272, %v270
    %v317 = vpack.c.b16 %v275, %v273
    %v318 = vpack.c.b16 %v276, %v274
    %v319 = vpack.c.b16 %v279, %v277
    %v320 = vpack.c.b16 %v280, %v278
    %v321 = vpack.c.b16 %v283, %v281
    %v322 = vpack.c.b16 %v284, %v282
    %v323 = vpack.c.b16 %v287, %v285
    %v324 = vpack.c.b16 %v288, %v286
    %v325 = vpack.c.b16 %v291, %v289
    %v326 = vpack.c.b16 %v292, %v290
    %v327 = vpack.c.b16 %v295, %v293
    %v328 = vpack.c.b16 %v296, %v294
    %361 = vmatpush.bf16.msra.mxu0 %v311
    %362 = vmatpush.bf16.msra.mxu0 %v309
    %363 = vmatpush.bf16.msra.mxu0 %v307
    %364 = vmatpush.bf16.msra.mxu0 %v305
    %365 = vmatpush.bf16.msra.mxu0 %v303
    %366 = vmatpush.bf16.msra.mxu0 %v301
    %367 = vmatpush.bf16.msra.mxu0 %v299
    %368 = vmatpush.bf16.msra.mxu0 %v297
    %369 = vmatmul.bf16.gmra.mxu0 %v161
    %v370 = vpop.f32.mrf.mxu0
    %v371 = vadd.f32 %v197, %v370
    %v372 = vpop.f32.mrf.mxu0
    %v373 = vadd.f32 %v197, %v372
    %374 = vdwg.mxu0
    %375 = vmatpush.bf16.msra.mxu0 %v327
    %376 = vmatpush.bf16.msra.mxu0 %v325
    %377 = vmatpush.bf16.msra.mxu0 %v323
    %378 = vmatpush.bf16.msra.mxu0 %v321
    %379 = vmatpush.bf16.msra.mxu0 %v319
    %380 = vmatpush.bf16.msra.mxu0 %v317
    %381 = vmatpush.bf16.msra.mxu0 %v315
    %382 = vmatpush.bf16.msra.mxu0 %v313
    %383 = vmatmul.bf16.gmra.mxu0 %v162
    %v384 = vpop.f32.mrf.mxu0
    %v385 = vadd.f32 %v371, %v384
    %v386 = vpop.f32.mrf.mxu0
    %v387 = vadd.f32 %v373, %v386
    %388 = vdwg.mxu0
    %389 = vmatpush.bf16.msra.mxu0 %v312
    %390 = vmatpush.bf16.msra.mxu0 %v310
    %391 = vmatpush.bf16.msra.mxu0 %v308
    %392 = vmatpush.bf16.msra.mxu0 %v306
    %393 = vmatpush.bf16.msra.mxu0 %v304
    %394 = vmatpush.bf16.msra.mxu0 %v302
    %395 = vmatpush.bf16.msra.mxu0 %v300
    %396 = vmatpush.bf16.msra.mxu0 %v298
    %397 = vmatmul.bf16.gmra.mxu0 %v161
    %v398 = vpop.f32.mrf.mxu0
    %v399 = vadd.f32 %v198, %v398
    %v400 = vpop.f32.mrf.mxu0
    %v401 = vadd.f32 %v198, %v400
    %402 = vdwg.mxu0
    %403 = vmatpush.bf16.msra.mxu0 %v328
    %404 = vmatpush.bf16.msra.mxu0 %v326
    %405 = vmatpush.bf16.msra.mxu0 %v324
    %406 = vmatpush.bf16.msra.mxu0 %v322
    %407 = vmatpush.bf16.msra.mxu0 %v320
    %408 = vmatpush.bf16.msra.mxu0 %v318
    %409 = vmatpush.bf16.msra.mxu0 %v316
    %410 = vmatpush.bf16.msra.mxu0 %v314
    %411 = vmatmul.bf16.gmra.mxu0 %v162
    %v412 = vpop.f32.mrf.mxu0
    %v413 = vadd.f32 %v399, %v412
    %v414 = vpop.f32.mrf.mxu0
    %v415 = vadd.f32 %v401, %v414
    %416 = vdwg.mxu0
    %v417 = vmax.f32 %v385, 0.0
    %v418 = vmax.f32 %v413, 0.0
    %v419 = vmax.f32 %v387, 0.0
    %v420 = vmax.f32 %v415, 0.0
    %v421 = vmin.f32 %v417, 6.0
    %v422 = vmin.f32 %v418, 6.0
    %v423 = vmin.f32 %v419, 6.0
    %v424 = vmin.f32 %v420, 6.0
    %v425 = vpack.c.bf16 %v423, %v421
    %v426 = vpack.c.bf16 %v424, %v422
    %v427 = vld [vmem:[#allocation7] sm:$0xf]
    %v428 = vld [vmem:[#allocation7 + $0x4] sm:$0xf]
    %v429 = vld [vmem:[#allocation7 + $0x8] sm:$0xf]
    %v430 = vld [vmem:[#allocation7 + $0xc] sm:$0xf]
    %v431 = vld [vmem:[#allocation7 + $0x10] sm:$0xf]
    %v432 = vld [vmem:[#allocation7 + $0x14] sm:$0xf]
    %v433 = vld [vmem:[#allocation7 + $0x18] sm:$0xf]
    %v434 = vld [vmem:[#allocation7 + $0x1c] sm:$0xf]
    %v435 = vld [vmem:[#allocation7 + $0x20] sm:$0xf]
    %v436 = vld [vmem:[#allocation7 + $0x24] sm:$0xf]
    %v437 = vld [vmem:[#allocation7 + $0x28] sm:$0xf]
    %v438 = vld [vmem:[#allocation7 + $0x2c] sm:$0xf]
    %v439 = vld [vmem:[#allocation7 + $0x30] sm:$0xf]
    %v440 = vld [vmem:[#allocation7 + $0x34] sm:$0xf]
    %v441 = vld [vmem:[#allocation7 + $0x38] sm:$0xf]
    %v442 = vld [vmem:[#allocation7 + $0x3c] sm:$0xf]
    %v443 = vld [vmem:[#allocation7 + $0x40] sm:$0xf]
    %v444 = vld [vmem:[#allocation7 + $0x44] sm:$0xf]
    %v445 = vld [vmem:[#allocation7 + $0x48] sm:$0xf]
    %v446 = vld [vmem:[#allocation7 + $0x4c] sm:$0xf]
    %v447 = vld [vmem:[#allocation7 + $0x50] sm:$0xf]
    %v448 = vld [vmem:[#allocation7 + $0x54] sm:$0xf]
    %v449 = vld [vmem:[#allocation7 + $0x58] sm:$0xf]
    %v450 = vld [vmem:[#allocation7 + $0x5c] sm:$0xf]
    %v451 = vld [vmem:[#allocation7 + $0x60] sm:$0xf]
    %v452 = vld [vmem:[#allocation7 + $0x64] sm:$0xf]
    %v453 = vld [vmem:[#allocation7 + $0x68] sm:$0xf]
    %v454 = vld [vmem:[#allocation7 + $0x6c] sm:$0xf]
    %v455 = vld [vmem:[#allocation7 + $0x70] sm:$0xf]
    %v456 = vld [vmem:[#allocation7 + $0x74] sm:$0xf]
    %v457 = vld [vmem:[#allocation7 + $0x78] sm:$0xf]
    %v458 = vld [vmem:[#allocation7 + $0x7c] sm:$0xf]
    %v459 = vld [vmem:[%s6] sm:$0x1]
    %v461 = vperm.slane %v459, 0
    %v495 = vunpack.c.l.b16 %v427
    %v496 = vunpack.c.l.b16 %v428
    %v497 = vunpack.c.l.b16 %v429
    %v498 = vunpack.c.l.b16 %v430
    %v499 = vunpack.c.l.b16 %v431
    %v500 = vunpack.c.l.b16 %v432
    %v501 = vunpack.c.l.b16 %v433
    %v502 = vunpack.c.l.b16 %v434
    %v503 = vunpack.c.l.b16 %v435
    %v504 = vunpack.c.l.b16 %v436
    %v505 = vunpack.c.l.b16 %v437
    %v506 = vunpack.c.l.b16 %v438
    %v507 = vunpack.c.l.b16 %v439
    %v508 = vunpack.c.l.b16 %v440
    %v509 = vunpack.c.l.b16 %v441
    %v510 = vunpack.c.l.b16 %v442
    %v511 = vunpack.c.l.b16 %v443
    %v512 = vunpack.c.l.b16 %v444
    %v513 = vunpack.c.l.b16 %v445
    %v514 = vunpack.c.l.b16 %v446
    %v515 = vunpack.c.l.b16 %v447
    %v516 = vunpack.c.l.b16 %v448
    %v517 = vunpack.c.l.b16 %v449
    %v518 = vunpack.c.l.b16 %v450
    %v519 = vunpack.c.l.b16 %v451
    %v520 = vunpack.c.l.b16 %v452
    %v521 = vunpack.c.l.b16 %v453
    %v522 = vunpack.c.l.b16 %v454
    %v523 = vunpack.c.l.b16 %v455
    %v524 = vunpack.c.l.b16 %v456
    %v525 = vunpack.c.l.b16 %v457
    %v526 = vunpack.c.l.b16 %v458
    %v527 = vpack.c.b16 %v496, %v495
    %v528 = vpack.c.b16 %v498, %v497
    %v529 = vpack.c.b16 %v500, %v499
    %v530 = vpack.c.b16 %v502, %v501
    %v531 = vpack.c.b16 %v504, %v503
    %v532 = vpack.c.b16 %v506, %v505
    %v533 = vpack.c.b16 %v508, %v507
    %v534 = vpack.c.b16 %v510, %v509
    %v535 = vpack.c.b16 %v512, %v511
    %v536 = vpack.c.b16 %v514, %v513
    %v537 = vpack.c.b16 %v516, %v515
    %v538 = vpack.c.b16 %v518, %v517
    %v539 = vpack.c.b16 %v520, %v519
    %v540 = vpack.c.b16 %v522, %v521
    %v541 = vpack.c.b16 %v524, %v523
    %v542 = vpack.c.b16 %v526, %v525
    %559 = vmatpush.bf16.msra.mxu0 %v534
    %560 = vmatpush.bf16.msra.mxu0 %v533
    %561 = vmatpush.bf16.msra.mxu0 %v532
    %562 = vmatpush.bf16.msra.mxu0 %v531
    %563 = vmatpush.bf16.msra.mxu0 %v530
    %564 = vmatpush.bf16.msra.mxu0 %v529
    %565 = vmatpush.bf16.msra.mxu0 %v528
    %566 = vmatpush.bf16.msra.mxu0 %v527
    %567 = vmatmul.bf16.gmra.mxu0 %v425
    %v568 = vpop.f32.mrf.mxu0
    %v569 = vadd.f32 %v461, %v568
    %v570 = vpop.f32.mrf.mxu0
    %v571 = vadd.f32 %v461, %v570
    %572 = vdwg.mxu0
    %573 = vmatpush.bf16.msra.mxu0 %v542
    %574 = vmatpush.bf16.msra.mxu0 %v541
    %575 = vmatpush.bf16.msra.mxu0 %v540
    %576 = vmatpush.bf16.msra.mxu0 %v539
    %577 = vmatpush.bf16.msra.mxu0 %v538
    %578 = vmatpush.bf16.msra.mxu0 %v537
    %579 = vmatpush.bf16.msra.mxu0 %v536
    %580 = vmatpush.bf16.msra.mxu0 %v535
    %581 = vmatmul.bf16.gmra.mxu0 %v426
    %v582 = vpop.f32.mrf.mxu0
    %v583 = vadd.f32 %v569, %v582
    %v584 = vpop.f32.mrf.mxu0
    %v585 = vadd.f32 %v571, %v584
    %586 = vdwg.mxu0
    %v587 = vtanh.pop %v583
    %v588 = vtanh.pop %v585
    %v589 = vmul.f32 %v587, 2.0
    %v590 = vmul.f32 %v588, 2.0
    %v591 = vmax.f32 %v583, 0.0
    %v592 = vmax.f32 %v585, 0.0
    %v593 = vand.u32 2147483647, %v583
    %v594 = vand.u32 2147483647, %v585
    %v595 = vsub.f32 0.0, %v593
    %v596 = vsub.f32 0.0, %v594
    %v597 = vmul.f32 %v595, 1.442695
    %v598 = vpow.pop %v597
    %v599 = vmul.f32 %v596, 1.442695
    %v600 = vpow.pop %v599
    %v601 = vadd.f32 %v598, 1.0
    %v602 = vlog2.pop %v601
    %v603 = vmul.f32 %v602, 0.6931472
    %v604 = vmul.f32 -0.5, %v598
    %v605 = vadd.f32 %v604, 1.0
    %v606 = vmul.f32 %v605, %v598
    %v607 = vand.u32 2147483647, %v598
    %vm608 = vcmp.lt.f32.partialorder %v607, 0.0004427343
    %v609 = vsel %vm608, %v606, %v603
    %v610 = vadd.f32 %v600, 1.0
    %v611 = vlog2.pop %v610
    %v612 = vmul.f32 %v611, 0.6931472
    %v613 = vmul.f32 -0.5, %v600
    %v614 = vadd.f32 %v613, 1.0
    %v615 = vmul.f32 %v614, %v600
    %v616 = vand.u32 2147483647, %v600
    %vm617 = vcmp.lt.f32.partialorder %v616, 0.0004427343
    %v618 = vsel %vm617, %v615, %v612
    %v619 = vadd.f32 %v591, %v609
    %v620 = vadd.f32 %v592, %v618
    %v621 = vlaneseq
    %v622 = vand.u32 %v621, 127
    %vm623 = vcmp.lt.s32.totalorder %v622, 8
    %v624 = vsel %vm623, %v589, %v619
    %v625 = vsel %vm623, %v590, %v620
    %626 = vst [vmem:[%s8] sm:$0xff] %v624
    %627 = vst [vmem:[%s8 + $0x8] sm:$0xff] %v625
    // Predicated region
    $region46: #{actor_forward.1} parent=1 // pred_check
      _
    $region47: #{actor_forward.1} parent=1 // pred_check_branch
      %629 = sbr.rel (0) target = $region49
    $region48: #{actor_forward.1} parent=1 // pred_region
      _
    $region49: #{actor_forward.1} parent=1 // pred_fallthru
      _
    // Predicated region
    $region50: #{actor_forward.1} parent=1 // pred_check
      _
    $region51: #{actor_forward.1} parent=1 // pred_check_branch
      %631 = sbr.rel (0) target = $region53
    $region52: #{actor_forward.1} parent=1 // pred_region
      _
    $region53: #{actor_forward.1} parent=1 // pred_fallthru
      _
    %632 = vsyncpa [#allocation4], 1
    %633 = vsyncpa [#allocation6], 1

</llo_original>
